<compile_context>
chip_gen: v6e
topology: v6e:2x2x1
jax: 0.10.0
libtpu: 0.0.40
codegen_flags: <defaults>
</compile_context>

<pallas_src>
import jax
import jax.numpy as jnp
from jax.experimental import pallas as pl
from jax.experimental.pallas import tpu as pltpu


def _round_up(n, m):
    return ((n + m - 1) // m) * m


def _ae_kernel(x_ref, w1_ref, b1_ref, w23_ref, b23_ref, w2p_ref, w4p_ref,
               bout_ref, out_ref):
    """x_ref:(TB, Din) f32; weights in compute dtype; biases f32;
    out_ref:(TB, latent+Din) f32 packed [latent | recon]."""
    cdt = w1_ref.dtype

    x = x_ref[...].astype(cdt)                                   # (TB, Din)

    # encoder[0] + ReLU
    h1 = jnp.dot(x, w1_ref[...], preferred_element_type=jnp.float32)
    h1 = jnp.maximum(h1 + b1_ref[...], 0.0)                      # (TB, H) f32

    # decoder[0] + ReLU with encoder[2] folded in:
    #   h2 = relu((h1 @ w2 + b2) @ w3 + b3) = relu(h1 @ (w2@w3) + (b2@w3 + b3))
    h2 = jnp.dot(h1.astype(cdt), w23_ref[...],
                 preferred_element_type=jnp.float32)
    h2 = jnp.maximum(h2 + b23_ref[...], 0.0)                     # (TB, H) f32

    # Packed output via block-diagonal weights (no lane concat / slicing):
    #   out[:, :L]  = h1 @ w2 + b2      (latent)
    #   out[:, L:]  = h2 @ w4 + b4      (reconstruction)
    out = (jnp.dot(h1.astype(cdt), w2p_ref[...],
                   preferred_element_type=jnp.float32)
           + jnp.dot(h2.astype(cdt), w4p_ref[...],
                     preferred_element_type=jnp.float32)
           + bout_ref[...])
    out_ref[...] = out.astype(out_ref.dtype)


def pack_params(params, compute_dtype=jnp.float32):
    """Pack nn.Linear params (weights stored (in, out)) once, reuse per call."""
    f32 = jnp.float32
    w1 = jnp.asarray(params["w1"], f32)                  # (Din, H)
    w2 = jnp.asarray(params["w2"], f32)                  # (H, L)
    w3 = jnp.asarray(params["w3"], f32)                  # (L, H)
    w4 = jnp.asarray(params["w4"], f32)                  # (H, Din)
    b1 = jnp.asarray(params["b1"], f32).reshape(1, -1)
    b2 = jnp.asarray(params["b2"], f32).reshape(1, -1)
    b3 = jnp.asarray(params["b3"], f32).reshape(1, -1)
    b4 = jnp.asarray(params["b4"], f32).reshape(1, -1)

    din, hidden = w1.shape
    latent = w2.shape[1]
    out_w = latent + din

    # Fold encoder[2] into decoder[0].
    w23 = w2 @ w3                                        # (H, H)
    b23 = b2 @ w3 + b3                                   # (1, H)

    # Block-diagonal output weights -> packed [latent | recon] output.
    w2p = jnp.zeros((hidden, out_w), f32).at[:, :latent].set(w2)
    w4p = jnp.zeros((hidden, out_w), f32).at[:, latent:].set(w4)
    bout = jnp.concatenate([b2, b4], axis=1)             # (1, out_w)

    cd = compute_dtype
    return dict(w1=w1.astype(cd), b1=b1,
                w23=w23.astype(cd), b23=b23,
                w2p=w2p.astype(cd), w4p=w4p.astype(cd), bout=bout)


def _choose_tb(batch, block_b):
    rows = _round_up(batch, 8)
    tb = min(rows, max(8, (block_b // 8) * 8))
    # Prefer >= 2 grid steps when the batch allows it (v7x has 2 TensorCores;
    # the "parallel" batch axis can then shard across them).
    if tb >= rows and rows >= 16:
        tb = _round_up((rows + 1) // 2, 8)
    return tb


def action_autoencoder(x, packed, *, block_b=4096):
    """x: (B, input_dim) f32. packed: output of pack_params.
    Returns (latent (B, latent_dim), recon (B, input_dim))."""
    B, din = x.shape
    assert packed["w1"].shape[0] == din
    out_w = packed["bout"].shape[1]
    latent_dim = out_w - din

    tb = _choose_tb(B, block_b)
    grid_b = pl.cdiv(_round_up(B, 8), tb)
    b_pad = grid_b * tb

    x_in = x if b_pad == B else jnp.pad(x, ((0, b_pad - B), (0, 0)))

    def resident(shape):
        return pl.BlockSpec(shape, lambda i: (0,) * len(shape))

    out = pl.pallas_call(
        _ae_kernel,
        out_shape=jax.ShapeDtypeStruct((b_pad, out_w), jnp.float32),
        grid=(grid_b,),
        in_specs=[
            pl.BlockSpec((tb, din), lambda i: (i, 0)),   # narrow x batch tile
            resident(packed["w1"].shape),
            resident(packed["b1"].shape),
            resident(packed["w23"].shape),
            resident(packed["b23"].shape),
            resident(packed["w2p"].shape),
            resident(packed["w4p"].shape),
            resident(packed["bout"].shape),
        ],
        out_specs=pl.BlockSpec((tb, out_w), lambda i: (i, 0)),  # packed narrow out
        compiler_params=pltpu.CompilerParams(
            dimension_semantics=("parallel",),
            vmem_limit_bytes=32 << 20),
    )(x_in, packed["w1"], packed["b1"], packed["w23"], packed["b23"],
      packed["w2p"], packed["w4p"], packed["bout"])

    return out[:B, :latent_dim], out[:B, latent_dim:]


def init_params(key, input_dim=10, latent_dim=3, hidden=64):
    """Synthetic init matching nn.Linear shapes; weights stored (in, out)."""
    ks = jax.random.split(key, 8)

    def lin(kw, kb, fan_in, fan_out):
        bound = 1.0 / jnp.sqrt(fan_in)
        w = jax.random.uniform(kw, (fan_in, fan_out), jnp.float32, -bound, bound)
        b = jax.random.uniform(kb, (1, fan_out), jnp.float32, -bound, bound)
        return w, b

    w1, b1 = lin(ks[0], ks[1], input_dim, hidden)    # encoder[0]
    w2, b2 = lin(ks[2], ks[3], hidden, latent_dim)   # encoder[2]
    w3, b3 = lin(ks[4], ks[5], latent_dim, hidden)   # decoder[0]
    w4, b4 = lin(ks[6], ks[7], hidden, input_dim)    # decoder[2]
    return dict(w1=w1, b1=b1, w2=w2, b2=b2, w3=w3, b3=b3, w4=w4, b4=b4)


def _reference(x, p):
    """Pure-JAX reference of the PyTorch module (unfolded, f32)."""
    h1 = jnp.maximum(x @ p["w1"] + p["b1"], 0.0)
    latent = h1 @ p["w2"] + p["b2"]
    h2 = jnp.maximum(latent @ p["w3"] + p["b3"], 0.0)
    recon = h2 @ p["w4"] + p["b4"]
    return latent, recon


if __name__ == "__main__":
    key = jax.random.PRNGKey(0)
    k_x, k_p, k_x2 = jax.random.split(key, 3)

    B, input_dim, latent_dim = 8, 10, 3
    x = jax.random.normal(k_x, (B, input_dim), jnp.float32)
    params = init_params(k_p, input_dim=input_dim, latent_dim=latent_dim)

    # Pack once (hoisted out of the per-call path).
    packed_f32 = pack_params(params, jnp.float32)

    # f32 path (single-tile)
    latent, recon = action_autoencoder(x, packed_f32)
    jax.block_until_ready((latent, recon))
    ref_latent, ref_recon = _reference(x, params)
    assert latent.shape == (B, latent_dim) and recon.shape == (B, input_dim)
    assert bool(jnp.allclose(latent, ref_latent, atol=1e-4, rtol=1e-4))
    assert bool(jnp.allclose(recon, ref_recon, atol=1e-4, rtol=1e-4))

    # multi-tile grid check (batch padded, several grid steps)
    B2 = 300
    x2 = jax.random.normal(k_x2, (B2, input_dim), jnp.float32)
    latent2, recon2 = action_autoencoder(x2, packed_f32, block_b=64)
    jax.block_until_ready((latent2, recon2))
    ref_latent2, ref_recon2 = _reference(x2, params)
    assert latent2.shape == (B2, latent_dim) and recon2.shape == (B2, input_dim)
    assert bool(jnp.allclose(latent2, ref_latent2, atol=1e-4, rtol=1e-4))
    assert bool(jnp.allclose(recon2, ref_recon2, atol=1e-4, rtol=1e-4))

    # bf16 MXU operands with f32 accumulation (x stays f32 in HBM, cast in-kernel)
    packed_bf16 = pack_params(params, jnp.bfloat16)
    latent_bf, recon_bf = action_autoencoder(x, packed_bf16)
    jax.block_until_ready((latent_bf, recon_bf))
    assert bool(jnp.allclose(latent_bf, ref_latent, atol=5e-2, rtol=5e-2))
    assert bool(jnp.allclose(recon_bf, ref_recon, atol=5e-2, rtol=5e-2))

    print("KERNEL_OK")
</pallas_src>

<mosaic_0001>
module attributes {stable_mosaic.version = 11 : i64} {
  func.func @_ae_kernel(%arg0: i32, %arg1: memref<8x10xf32, #tpu.memory_space<vmem>>, %arg2: memref<10x64xf32, #tpu.memory_space<vmem>>, %arg3: memref<1x64xf32, #tpu.memory_space<vmem>>, %arg4: memref<64x64xf32, #tpu.memory_space<vmem>>, %arg5: memref<1x64xf32, #tpu.memory_space<vmem>>, %arg6: memref<64x13xf32, #tpu.memory_space<vmem>>, %arg7: memref<64x13xf32, #tpu.memory_space<vmem>>, %arg8: memref<1x13xf32, #tpu.memory_space<vmem>>, %arg9: memref<8x13xf32, #tpu.memory_space<vmem>>) attributes {dimension_semantics = [#tpu.dimension_semantics<parallel>], iteration_bounds = array<i64: 1>, scalar_prefetch = 0 : i64, scratch_operands = 0 : i64, tpu.core_type = #tpu.core_type<tc>, window_params = [{transform_indices = @transform_0, window_bounds = array<i64: 8, 10>}, {pipeline_mode = #tpu.pipeline_mode<synchronous>, transform_indices = @transform_1, window_bounds = array<i64: 10, 64>}, {pipeline_mode = #tpu.pipeline_mode<synchronous>, transform_indices = @transform_2, window_bounds = array<i64: 1, 64>}, {pipeline_mode = #tpu.pipeline_mode<synchronous>, transform_indices = @transform_3, window_bounds = array<i64: 64, 64>}, {pipeline_mode = #tpu.pipeline_mode<synchronous>, transform_indices = @transform_4, window_bounds = array<i64: 1, 64>}, {pipeline_mode = #tpu.pipeline_mode<synchronous>, transform_indices = @transform_5, window_bounds = array<i64: 64, 13>}, {pipeline_mode = #tpu.pipeline_mode<synchronous>, transform_indices = @transform_6, window_bounds = array<i64: 64, 13>}, {pipeline_mode = #tpu.pipeline_mode<synchronous>, transform_indices = @transform_7, window_bounds = array<i64: 1, 13>}, {transform_indices = @transform_8, window_bounds = array<i64: 8, 13>}]} {
    %c0 = arith.constant 0 : index
    %c0_0 = arith.constant 0 : index
    %0 = vector.load %arg1[%c0, %c0_0] : memref<8x10xf32, #tpu.memory_space<vmem>>, vector<8x10xf32>
    %c0_1 = arith.constant 0 : index
    %c0_2 = arith.constant 0 : index
    %1 = vector.load %arg2[%c0_1, %c0_2] : memref<10x64xf32, #tpu.memory_space<vmem>>, vector<10x64xf32>
    %cst = arith.constant dense<0.000000e+00> : vector<8x64xf32>
    %2 = tpu.matmul %0, %1, %cst {dimension_numbers = #tpu.dot_dimension_numbers<[1], [0], [0], [1], [0, 0, 1, 1], [], []>} : vector<8x10xf32>, vector<10x64xf32>, vector<8x64xf32> -> vector<8x64xf32>
    %c0_3 = arith.constant 0 : index
    %c0_4 = arith.constant 0 : index
    %3 = vector.load %arg3[%c0_3, %c0_4] : memref<1x64xf32, #tpu.memory_space<vmem>>, vector<1x64xf32>
    %4 = vector.broadcast %3 : vector<1x64xf32> to vector<8x64xf32>
    %5 = arith.addf %2, %4 : vector<8x64xf32>
    %cst_5 = arith.constant 0.000000e+00 : f32
    %6 = vector.broadcast %cst_5 : f32 to vector<8x64xf32>
    %7 = arith.maximumf %5, %6 : vector<8x64xf32>
    %c0_6 = arith.constant 0 : index
    %c0_7 = arith.constant 0 : index
    %8 = vector.load %arg4[%c0_6, %c0_7] : memref<64x64xf32, #tpu.memory_space<vmem>>, vector<64x64xf32>
    %cst_8 = arith.constant dense<0.000000e+00> : vector<8x64xf32>
    %9 = tpu.matmul %7, %8, %cst_8 {dimension_numbers = #tpu.dot_dimension_numbers<[1], [0], [0], [1], [0, 0, 1, 1], [], []>} : vector<8x64xf32>, vector<64x64xf32>, vector<8x64xf32> -> vector<8x64xf32>
    %c0_9 = arith.constant 0 : index
    %c0_10 = arith.constant 0 : index
    %10 = vector.load %arg5[%c0_9, %c0_10] : memref<1x64xf32, #tpu.memory_space<vmem>>, vector<1x64xf32>
    %11 = vector.broadcast %10 : vector<1x64xf32> to vector<8x64xf32>
    %12 = arith.addf %9, %11 : vector<8x64xf32>
    %cst_11 = arith.constant 0.000000e+00 : f32
    %13 = vector.broadcast %cst_11 : f32 to vector<8x64xf32>
    %14 = arith.maximumf %12, %13 : vector<8x64xf32>
    %c0_12 = arith.constant 0 : index
    %c0_13 = arith.constant 0 : index
    %15 = vector.load %arg6[%c0_12, %c0_13] : memref<64x13xf32, #tpu.memory_space<vmem>>, vector<64x13xf32>
    %cst_14 = arith.constant dense<0.000000e+00> : vector<8x13xf32>
    %16 = tpu.matmul %7, %15, %cst_14 {dimension_numbers = #tpu.dot_dimension_numbers<[1], [0], [0], [1], [0, 0, 1, 1], [], []>} : vector<8x64xf32>, vector<64x13xf32>, vector<8x13xf32> -> vector<8x13xf32>
    %c0_15 = arith.constant 0 : index
    %c0_16 = arith.constant 0 : index
    %17 = vector.load %arg7[%c0_15, %c0_16] : memref<64x13xf32, #tpu.memory_space<vmem>>, vector<64x13xf32>
    %cst_17 = arith.constant dense<0.000000e+00> : vector<8x13xf32>
    %18 = tpu.matmul %14, %17, %cst_17 {dimension_numbers = #tpu.dot_dimension_numbers<[1], [0], [0], [1], [0, 0, 1, 1], [], []>} : vector<8x64xf32>, vector<64x13xf32>, vector<8x13xf32> -> vector<8x13xf32>
    %19 = arith.addf %16, %18 : vector<8x13xf32>
    %c0_18 = arith.constant 0 : index
    %c0_19 = arith.constant 0 : index
    %20 = vector.load %arg8[%c0_18, %c0_19] : memref<1x13xf32, #tpu.memory_space<vmem>>, vector<1x13xf32>
    %21 = vector.broadcast %20 : vector<1x13xf32> to vector<8x13xf32>
    %22 = arith.addf %19, %21 : vector<8x13xf32>
    %c0_20 = arith.constant 0 : index
    %c0_21 = arith.constant 0 : index
    %23 = vector.load %arg9[%c0_20, %c0_21] : memref<8x13xf32, #tpu.memory_space<vmem>>, vector<8x13xf32>
    tpu.vector_store %arg9[%c0_20, %c0_21], %22 {strides = array<i32>} : memref<8x13xf32, #tpu.memory_space<vmem>>, vector<8x13xf32>,
    return
  }
  func.func @transform_0(%arg0: i32) -> (i32, i32) {
    %c0_i32 = arith.constant 0 : i32
    %c0_i32_0 = arith.constant 0 : i32
    return %arg0, %c0_i32 : i32, i32
  }
  func.func @transform_1(%arg0: i32) -> (i32, i32) {
    %c0_i32 = arith.constant 0 : i32
    %c0_i32_0 = arith.constant 0 : i32
    %c0_i32_1 = arith.constant 0 : i32
    return %c0_i32, %c0_i32_0 : i32, i32
  }
  func.func @transform_2(%arg0: i32) -> (i32, i32) {
    %c0_i32 = arith.constant 0 : i32
    %c0_i32_0 = arith.constant 0 : i32
    %c0_i32_1 = arith.constant 0 : i32
    return %c0_i32, %c0_i32_0 : i32, i32
  }
  func.func @transform_3(%arg0: i32) -> (i32, i32) {
    %c0_i32 = arith.constant 0 : i32
    %c0_i32_0 = arith.constant 0 : i32
    %c0_i32_1 = arith.constant 0 : i32
    return %c0_i32, %c0_i32_0 : i32, i32
  }
  func.func @transform_4(%arg0: i32) -> (i32, i32) {
    %c0_i32 = arith.constant 0 : i32
    %c0_i32_0 = arith.constant 0 : i32
    %c0_i32_1 = arith.constant 0 : i32
    return %c0_i32, %c0_i32_0 : i32, i32
  }
  func.func @transform_5(%arg0: i32) -> (i32, i32) {
    %c0_i32 = arith.constant 0 : i32
    %c0_i32_0 = arith.constant 0 : i32
    %c0_i32_1 = arith.constant 0 : i32
    return %c0_i32, %c0_i32_0 : i32, i32
  }
  func.func @transform_6(%arg0: i32) -> (i32, i32) {
    %c0_i32 = arith.constant 0 : i32
    %c0_i32_0 = arith.constant 0 : i32
    %c0_i32_1 = arith.constant 0 : i32
    return %c0_i32, %c0_i32_0 : i32, i32
  }
  func.func @transform_7(%arg0: i32) -> (i32, i32) {
    %c0_i32 = arith.constant 0 : i32
    %c0_i32_0 = arith.constant 0 : i32
    %c0_i32_1 = arith.constant 0 : i32
    return %c0_i32, %c0_i32_0 : i32, i32
  }
  func.func @transform_8(%arg0: i32) -> (i32, i32) {
    %c0_i32 = arith.constant 0 : i32
    %c0_i32_0 = arith.constant 0 : i32
    return %arg0, %c0_i32 : i32, i32
  }
}

</mosaic_0001>

<llo_original>
// kernel: tpu_custom_call.1
$region0: #{tpu_custom_call.1}
  #allocation0 [shape = 'u32[]', space=smem, size = 0x4, offset = 0x4, fixed_abs, tag = 'smem constant byte address 0x4 - core index']
  #allocation1 [shape = 'u32[144,128]{1,0:T(1,128)}', space=vmem, size = 0x12000, scoped, tag = 'internal scratch']
  %s0 = inlined_call_operand.vmem [shape: f32[8,10], index: 0, kind: input, shape index: {}]
  %s1 = inlined_call_operand.vmem [shape: f32[10,64], index: 1, kind: input, shape index: {}]
  %s2 = inlined_call_operand.vmem [shape: f32[1,64], index: 2, kind: input, shape index: {}]
  %s3 = inlined_call_operand.vmem [shape: f32[64,64], index: 3, kind: input, shape index: {}]
  %s4 = inlined_call_operand.vmem [shape: f32[1,64], index: 4, kind: input, shape index: {}]
  %s5 = inlined_call_operand.vmem [shape: f32[64,13], index: 5, kind: input, shape index: {}]
  %s6 = inlined_call_operand.vmem [shape: f32[64,13], index: 6, kind: input, shape index: {}]
  %s7 = inlined_call_operand.vmem [shape: f32[1,13], index: 7, kind: input, shape index: {}]
  %s8 = inlined_call_operand.hbm [shape: f32[8,13], index: 8, kind: output, shape index: {}]
  %s9 = sld [smem:[#allocation0]]
  $region42: #{tpu_custom_call.1} parent=0
    _
  %s11 = ssub.s32 1, %s9
  %s12 = scalar_select 0, %s11, %s9
  $region1: #{tpu_custom_call.1} parent=0
    #allocation2 [shape = 'u8[4096]{0}', space=vmem, size = 0x1000, scoped, tag = 'output window, operand 0, single buffered']
    #allocation3 [shape = 's32[1]{0}', space=sflag, size = 0x4, scoped, tag = 'scoped memory for tpu_custom_call.1']
    %13 = vsyncpa [#allocation3], 0
    // Predicated region
    $region2: #{tpu_custom_call.1} parent=1 // pred_check
      _
    $region3: #{tpu_custom_call.1} parent=1 // pred_check_branch
      %15 = sbr.rel (0) target = $region5
    $region4: #{tpu_custom_call.1} parent=1 // pred_region
      _
    $region5: #{tpu_custom_call.1} parent=1 // pred_fallthru
      _
    // Predicated region
    $region6: #{tpu_custom_call.1} parent=1 // pred_check
      _
    $region7: #{tpu_custom_call.1} parent=1 // pred_check_branch
      %17 = sbr.rel (0) target = $region9
    $region8: #{tpu_custom_call.1} parent=1 // pred_region
      _
    $region9: #{tpu_custom_call.1} parent=1 // pred_fallthru
      _
    // Predicated region
    $region10: #{tpu_custom_call.1} parent=1 // pred_check
      _
    $region11: #{tpu_custom_call.1} parent=1 // pred_check_branch
      %19 = sbr.rel (0) target = $region13
    $region12: #{tpu_custom_call.1} parent=1 // pred_region
      _
    $region13: #{tpu_custom_call.1} parent=1 // pred_fallthru
      _
    // Predicated region
    $region14: #{tpu_custom_call.1} parent=1 // pred_check
      _
    $region15: #{tpu_custom_call.1} parent=1 // pred_check_branch
      %21 = sbr.rel (0) target = $region17
    $region16: #{tpu_custom_call.1} parent=1 // pred_region
      _
    $region17: #{tpu_custom_call.1} parent=1 // pred_fallthru
      _
    // Predicated region
    $region18: #{tpu_custom_call.1} parent=1 // pred_check
      _
    $region19: #{tpu_custom_call.1} parent=1 // pred_check_branch
      %23 = sbr.rel (0) target = $region21
    $region20: #{tpu_custom_call.1} parent=1 // pred_region
      _
    $region21: #{tpu_custom_call.1} parent=1 // pred_fallthru
      _
    // Predicated region
    $region22: #{tpu_custom_call.1} parent=1 // pred_check
      _
    $region23: #{tpu_custom_call.1} parent=1 // pred_check_branch
      %25 = sbr.rel (0) target = $region25
    $region24: #{tpu_custom_call.1} parent=1 // pred_region
      _
    $region25: #{tpu_custom_call.1} parent=1 // pred_fallthru
      _
    // Predicated region
    $region26: #{tpu_custom_call.1} parent=1 // pred_check
      _
    $region27: #{tpu_custom_call.1} parent=1 // pred_check_branch
      %27 = sbr.rel (0) target = $region29
    $region28: #{tpu_custom_call.1} parent=1 // pred_region
      _
    $region29: #{tpu_custom_call.1} parent=1 // pred_fallthru
      _
    // Predicated region
    $region30: #{tpu_custom_call.1} parent=1 // pred_check
      _
    $region31: #{tpu_custom_call.1} parent=1 // pred_check_branch
      %29 = sbr.rel (0) target = $region33
    $region32: #{tpu_custom_call.1} parent=1 // pred_region
      _
    $region33: #{tpu_custom_call.1} parent=1 // pred_fallthru
      _
    %v30 = vld [vmem:[%s0] sm:$0xff]
    %v31 = vld [vmem:[%s1] sm:$0xff]
    %v32 = vld [vmem:[%s1 + $0x8] sm:$0x3]
    %v33 = vld [vmem:[%s2] sm:$0x1]
    %v35 = vlaneseq
    %v36 = vshrl.u32 %v35, 7
    %v37 = vsub.s32 0, %v36
    %v38 = vrot.slane %v33, %v37
    %vm40 = vcmask 80896
    %v42 = vsel %vm40, %v30, 0
    %vm44 = vcmask 1041408
    %v46 = vsel %vm44, %v32, 0
    %48 = vmatprep.subr.mxu0 0.0
    %49 = vmatpush1.msra.mxu0 0.0
    %50 = vmatprep.subr.mxu0 0.0
    %51 = vmatpush1.msra.mxu0 0.0
    %52 = vmatprep.subr.mxu0 0.0
    %53 = vmatpush1.msra.mxu0 0.0
    %54 = vmatprep.subr.mxu0 0.0
    %55 = vmatpush1.msra.mxu0 0.0
    %56 = vmatprep.subr.mxu0 0.0
    %57 = vmatpush1.msra.mxu0 0.0
    %58 = vmatprep.subr.mxu0 0.0
    %59 = vmatpush1.msra.mxu0 0.0
    %60 = vmatprep.subr.mxu0 0.0
    %61 = vmatpush1.msra.mxu0 0.0
    %62 = vmatprep.subr.mxu0 0.0
    %63 = vmatpush1.msra.mxu0 0.0
    %64 = vmatprep.subr.mxu0 0.0
    %65 = vmatpush1.msra.mxu0 0.0
    %66 = vmatprep.subr.mxu0 0.0
    %67 = vmatpush1.msra.mxu0 0.0
    %68 = vmatprep.subr.mxu0 0.0
    %69 = vmatpush1.msra.mxu0 0.0
    %70 = vmatprep.subr.mxu0 0.0
    %71 = vmatpush1.msra.mxu0 0.0
    %72 = vmatprep.subr.mxu0 0.0
    %73 = vmatpush1.msra.mxu0 0.0
    %74 = vmatprep.subr.mxu0 0.0
    %75 = vmatpush1.msra.mxu0 0.0
    %76 = vmatprep.subr.mxu0 0.0
    %77 = vmatpush1.msra.mxu0 %v46
    %78 = vmatprep.subr.mxu0 0.0
    %79 = vmatpush1.msra.mxu0 %v31
    %80 = vmatprep.subr.mxu0 0.0
    %81 = vmatpush2.msra.mxu0 0.0
    %82 = vmatprep.subr.mxu0 0.0
    %83 = vmatpush2.msra.mxu0 0.0
    %84 = vmatprep.subr.mxu0 0.0
    %85 = vmatpush2.msra.mxu0 0.0
    %86 = vmatprep.subr.mxu0 0.0
    %87 = vmatpush2.msra.mxu0 0.0
    %88 = vmatprep.subr.mxu0 0.0
    %89 = vmatpush2.msra.mxu0 0.0
    %90 = vmatprep.subr.mxu0 0.0
    %91 = vmatpush2.msra.mxu0 0.0
    %92 = vmatprep.subr.mxu0 0.0
    %93 = vmatpush2.msra.mxu0 0.0
    %94 = vmatprep.subr.mxu0 0.0
    %95 = vmatpush2.msra.mxu0 0.0
    %96 = vmatprep.subr.mxu0 0.0
    %97 = vmatpush2.msra.mxu0 0.0
    %98 = vmatprep.subr.mxu0 0.0
    %99 = vmatpush2.msra.mxu0 0.0
    %100 = vmatprep.subr.mxu0 0.0
    %101 = vmatpush2.msra.mxu0 0.0
    %102 = vmatprep.subr.mxu0 0.0
    %103 = vmatpush2.msra.mxu0 0.0
    %104 = vmatprep.subr.mxu0 0.0
    %105 = vmatpush2.msra.mxu0 0.0
    %106 = vmatprep.subr.mxu0 0.0
    %107 = vmatpush2.msra.mxu0 0.0
    %108 = vmatprep.subr.mxu0 0.0
    %109 = vmatpush2.msra.mxu0 0.0
    %110 = vmatprep.subr.mxu0 0.0
    %111 = vmatpush2.msra.mxu0 0.0
    %112 = vmatprep.mubr.f32.mxu0 0.0
    %113 = vmatmul.mubr.f32.gmra.mxu0 %v42
    %v114 = vpop.f32.mrf.mxu0
    %v115 = vadd.f32 %v38, %v114
    %v116 = vpop.f32.mrf.mxu0
    %117 = vdwg.mxu0
    %v118 = vmax.f32 %v115, 0.0
    %v119 = vld [vmem:[%s3] sm:$0xff]
    %v120 = vld [vmem:[%s3 + $0x8] sm:$0xff]
    %v121 = vld [vmem:[%s3 + $0x10] sm:$0xff]
    %v122 = vld [vmem:[%s3 + $0x18] sm:$0xff]
    %v123 = vld [vmem:[%s3 + $0x20] sm:$0xff]
    %v124 = vld [vmem:[%s3 + $0x28] sm:$0xff]
    %v125 = vld [vmem:[%s3 + $0x30] sm:$0xff]
    %v126 = vld [vmem:[%s3 + $0x38] sm:$0xff]
    %v127 = vld [vmem:[%s4] sm:$0x1]
    %v129 = vlaneseq
    %v130 = vshrl.u32 %v129, 7
    %v131 = vsub.s32 0, %v130
    %v132 = vrot.slane %v127, %v131
    %vm134 = vcmask 523264
    %v136 = vsel %vm134, %v118, 0
    %138 = vmatprep.subr.mxu0 0.0
    %139 = vmatpush1.msra.mxu0 0.0
    %140 = vmatprep.subr.mxu0 0.0
    %141 = vmatpush1.msra.mxu0 0.0
    %142 = vmatprep.subr.mxu0 0.0
    %143 = vmatpush1.msra.mxu0 0.0
    %144 = vmatprep.subr.mxu0 0.0
    %145 = vmatpush1.msra.mxu0 0.0
    %146 = vmatprep.subr.mxu0 0.0
    %147 = vmatpush1.msra.mxu0 0.0
    %148 = vmatprep.subr.mxu0 0.0
    %149 = vmatpush1.msra.mxu0 0.0
    %150 = vmatprep.subr.mxu0 0.0
    %151 = vmatpush1.msra.mxu0 0.0
    %152 = vmatprep.subr.mxu0 0.0
    %153 = vmatpush1.msra.mxu0 0.0
    %154 = vmatprep.subr.mxu0 0.0
    %155 = vmatpush1.msra.mxu0 %v126
    %156 = vmatprep.subr.mxu0 0.0
    %157 = vmatpush1.msra.mxu0 %v125
    %158 = vmatprep.subr.mxu0 0.0
    %159 = vmatpush1.msra.mxu0 %v124
    %160 = vmatprep.subr.mxu0 0.0
    %161 = vmatpush1.msra.mxu0 %v123
    %162 = vmatprep.subr.mxu0 0.0
    %163 = vmatpush1.msra.mxu0 %v122
    %164 = vmatprep.subr.mxu0 0.0
    %165 = vmatpush1.msra.mxu0 %v121
    %166 = vmatprep.subr.mxu0 0.0
    %167 = vmatpush1.msra.mxu0 %v120
    %168 = vmatprep.subr.mxu0 0.0
    %169 = vmatpush1.msra.mxu0 %v119
    %170 = vmatprep.subr.mxu0 0.0
    %171 = vmatpush2.msra.mxu0 0.0
    %172 = vmatprep.subr.mxu0 0.0
    %173 = vmatpush2.msra.mxu0 0.0
    %174 = vmatprep.subr.mxu0 0.0
    %175 = vmatpush2.msra.mxu0 0.0
    %176 = vmatprep.subr.mxu0 0.0
    %177 = vmatpush2.msra.mxu0 0.0
    %178 = vmatprep.subr.mxu0 0.0
    %179 = vmatpush2.msra.mxu0 0.0
    %180 = vmatprep.subr.mxu0 0.0
    %181 = vmatpush2.msra.mxu0 0.0
    %182 = vmatprep.subr.mxu0 0.0
    %183 = vmatpush2.msra.mxu0 0.0
    %184 = vmatprep.subr.mxu0 0.0
    %185 = vmatpush2.msra.mxu0 0.0
    %186 = vmatprep.subr.mxu0 0.0
    %187 = vmatpush2.msra.mxu0 0.0
    %188 = vmatprep.subr.mxu0 0.0
    %189 = vmatpush2.msra.mxu0 0.0
    %190 = vmatprep.subr.mxu0 0.0
    %191 = vmatpush2.msra.mxu0 0.0
    %192 = vmatprep.subr.mxu0 0.0
    %193 = vmatpush2.msra.mxu0 0.0
    %194 = vmatprep.subr.mxu0 0.0
    %195 = vmatpush2.msra.mxu0 0.0
    %196 = vmatprep.subr.mxu0 0.0
    %197 = vmatpush2.msra.mxu0 0.0
    %198 = vmatprep.subr.mxu0 0.0
    %199 = vmatpush2.msra.mxu0 0.0
    %200 = vmatprep.subr.mxu0 0.0
    %201 = vmatpush2.msra.mxu0 0.0
    %202 = vmatprep.mubr.f32.mxu0 0.0
    %203 = vmatmul.mubr.f32.gmra.mxu0 %v136
    %v204 = vpop.f32.mrf.mxu0
    %v205 = vadd.f32 %v132, %v204
    %v206 = vpop.f32.mrf.mxu0
    %207 = vdwg.mxu0
    %v208 = vmax.f32 %v205, 0.0
    %v209 = vld [vmem:[%s5] sm:$0xff]
    %v210 = vld [vmem:[%s5 + $0x8] sm:$0xff]
    %v211 = vld [vmem:[%s5 + $0x10] sm:$0xff]
    %v212 = vld [vmem:[%s5 + $0x18] sm:$0xff]
    %v213 = vld [vmem:[%s5 + $0x20] sm:$0xff]
    %v214 = vld [vmem:[%s5 + $0x28] sm:$0xff]
    %v215 = vld [vmem:[%s5 + $0x30] sm:$0xff]
    %v216 = vld [vmem:[%s5 + $0x38] sm:$0xff]
    %v217 = vld [vmem:[%s6] sm:$0xff]
    %v218 = vld [vmem:[%s6 + $0x8] sm:$0xff]
    %v219 = vld [vmem:[%s6 + $0x10] sm:$0xff]
    %v220 = vld [vmem:[%s6 + $0x18] sm:$0xff]
    %v221 = vld [vmem:[%s6 + $0x20] sm:$0xff]
    %v222 = vld [vmem:[%s6 + $0x28] sm:$0xff]
    %v223 = vld [vmem:[%s6 + $0x30] sm:$0xff]
    %v224 = vld [vmem:[%s6 + $0x38] sm:$0xff]
    %v226 = vsel %vm134, %v208, 0
    %228 = vmatprep.subr.mxu0 0.0
    %229 = vmatpush1.msra.mxu0 0.0
    %230 = vmatprep.subr.mxu0 0.0
    %231 = vmatpush1.msra.mxu0 0.0
    %232 = vmatprep.subr.mxu0 0.0
    %233 = vmatpush1.msra.mxu0 0.0
    %234 = vmatprep.subr.mxu0 0.0
    %235 = vmatpush1.msra.mxu0 0.0
    %236 = vmatprep.subr.mxu0 0.0
    %237 = vmatpush1.msra.mxu0 0.0
    %238 = vmatprep.subr.mxu0 0.0
    %239 = vmatpush1.msra.mxu0 0.0
    %240 = vmatprep.subr.mxu0 0.0
    %241 = vmatpush1.msra.mxu0 0.0
    %242 = vmatprep.subr.mxu0 0.0
    %243 = vmatpush1.msra.mxu0 0.0
    %244 = vmatprep.subr.mxu0 0.0
    %245 = vmatpush1.msra.mxu0 %v224
    %246 = vmatprep.subr.mxu0 0.0
    %247 = vmatpush1.msra.mxu0 %v223
    %248 = vmatprep.subr.mxu0 0.0
    %249 = vmatpush1.msra.mxu0 %v222
    %250 = vmatprep.subr.mxu0 0.0
    %251 = vmatpush1.msra.mxu0 %v221
    %252 = vmatprep.subr.mxu0 0.0
    %253 = vmatpush1.msra.mxu0 %v220
    %254 = vmatprep.subr.mxu0 0.0
    %255 = vmatpush1.msra.mxu0 %v219
    %256 = vmatprep.subr.mxu0 0.0
    %257 = vmatpush1.msra.mxu0 %v218
    %258 = vmatprep.subr.mxu0 0.0
    %259 = vmatpush1.msra.mxu0 %v217
    %260 = vmatprep.subr.mxu0 0.0
    %261 = vmatpush2.msra.mxu0 0.0
    %262 = vmatprep.subr.mxu0 0.0
    %263 = vmatpush2.msra.mxu0 0.0
    %264 = vmatprep.subr.mxu0 0.0
    %265 = vmatpush2.msra.mxu0 0.0
    %266 = vmatprep.subr.mxu0 0.0
    %267 = vmatpush2.msra.mxu0 0.0
    %268 = vmatprep.subr.mxu0 0.0
    %269 = vmatpush2.msra.mxu0 0.0
    %270 = vmatprep.subr.mxu0 0.0
    %271 = vmatpush2.msra.mxu0 0.0
    %272 = vmatprep.subr.mxu0 0.0
    %273 = vmatpush2.msra.mxu0 0.0
    %274 = vmatprep.subr.mxu0 0.0
    %275 = vmatpush2.msra.mxu0 0.0
    %276 = vmatprep.subr.mxu0 0.0
    %277 = vmatpush2.msra.mxu0 0.0
    %278 = vmatprep.subr.mxu0 0.0
    %279 = vmatpush2.msra.mxu0 0.0
    %280 = vmatprep.subr.mxu0 0.0
    %281 = vmatpush2.msra.mxu0 0.0
    %282 = vmatprep.subr.mxu0 0.0
    %283 = vmatpush2.msra.mxu0 0.0
    %284 = vmatprep.subr.mxu0 0.0
    %285 = vmatpush2.msra.mxu0 0.0
    %286 = vmatprep.subr.mxu0 0.0
    %287 = vmatpush2.msra.mxu0 0.0
    %288 = vmatprep.subr.mxu0 0.0
    %289 = vmatpush2.msra.mxu0 0.0
    %290 = vmatprep.subr.mxu0 0.0
    %291 = vmatpush2.msra.mxu0 0.0
    %292 = vmatprep.mubr.f32.mxu0 0.0
    %293 = vmatmul.mubr.f32.gmra.mxu0 %v226
    %v294 = vpop.f32.mrf.mxu0
    %v295 = vadd.f32 0.0, %v294
    %v296 = vpop.f32.mrf.mxu0
    %297 = vdwg.mxu0
    %298 = vmatprep.subr.mxu0 0.0
    %299 = vmatpush1.msra.mxu0 0.0
    %300 = vmatprep.subr.mxu0 0.0
    %301 = vmatpush1.msra.mxu0 0.0
    %302 = vmatprep.subr.mxu0 0.0
    %303 = vmatpush1.msra.mxu0 0.0
    %304 = vmatprep.subr.mxu0 0.0
    %305 = vmatpush1.msra.mxu0 0.0
    %306 = vmatprep.subr.mxu0 0.0
    %307 = vmatpush1.msra.mxu0 0.0
    %308 = vmatprep.subr.mxu0 0.0
    %309 = vmatpush1.msra.mxu0 0.0
    %310 = vmatprep.subr.mxu0 0.0
    %311 = vmatpush1.msra.mxu0 0.0
    %312 = vmatprep.subr.mxu0 0.0
    %313 = vmatpush1.msra.mxu0 0.0
    %314 = vmatprep.subr.mxu0 0.0
    %315 = vmatpush1.msra.mxu0 %v216
    %316 = vmatprep.subr.mxu0 0.0
    %317 = vmatpush1.msra.mxu0 %v215
    %318 = vmatprep.subr.mxu0 0.0
    %319 = vmatpush1.msra.mxu0 %v214
    %320 = vmatprep.subr.mxu0 0.0
    %321 = vmatpush1.msra.mxu0 %v213
    %322 = vmatprep.subr.mxu0 0.0
    %323 = vmatpush1.msra.mxu0 %v212
    %324 = vmatprep.subr.mxu0 0.0
    %325 = vmatpush1.msra.mxu0 %v211
    %326 = vmatprep.subr.mxu0 0.0
    %327 = vmatpush1.msra.mxu0 %v210
    %328 = vmatprep.subr.mxu0 0.0
    %329 = vmatpush1.msra.mxu0 %v209
    %330 = vmatprep.subr.mxu0 0.0
    %331 = vmatpush2.msra.mxu0 0.0
    %332 = vmatprep.subr.mxu0 0.0
    %333 = vmatpush2.msra.mxu0 0.0
    %334 = vmatprep.subr.mxu0 0.0
    %335 = vmatpush2.msra.mxu0 0.0
    %336 = vmatprep.subr.mxu0 0.0
    %337 = vmatpush2.msra.mxu0 0.0
    %338 = vmatprep.subr.mxu0 0.0
    %339 = vmatpush2.msra.mxu0 0.0
    %340 = vmatprep.subr.mxu0 0.0
    %341 = vmatpush2.msra.mxu0 0.0
    %342 = vmatprep.subr.mxu0 0.0
    %343 = vmatpush2.msra.mxu0 0.0
    %344 = vmatprep.subr.mxu0 0.0
    %345 = vmatpush2.msra.mxu0 0.0
    %346 = vmatprep.subr.mxu0 0.0
    %347 = vmatpush2.msra.mxu0 0.0
    %348 = vmatprep.subr.mxu0 0.0
    %349 = vmatpush2.msra.mxu0 0.0
    %350 = vmatprep.subr.mxu0 0.0
    %351 = vmatpush2.msra.mxu0 0.0
    %352 = vmatprep.subr.mxu0 0.0
    %353 = vmatpush2.msra.mxu0 0.0
    %354 = vmatprep.subr.mxu0 0.0
    %355 = vmatpush2.msra.mxu0 0.0
    %356 = vmatprep.subr.mxu0 0.0
    %357 = vmatpush2.msra.mxu0 0.0
    %358 = vmatprep.subr.mxu0 0.0
    %359 = vmatpush2.msra.mxu0 0.0
    %360 = vmatprep.subr.mxu0 0.0
    %361 = vmatpush2.msra.mxu0 0.0
    %362 = vmatprep.mubr.f32.mxu0 0.0
    %363 = vmatmul.mubr.f32.gmra.mxu0 %v136
    %v364 = vpop.f32.mrf.mxu0
    %v365 = vadd.f32 %v295, %v364
    %v366 = vpop.f32.mrf.mxu0
    %367 = vdwg.mxu0
    %v368 = vld [vmem:[%s7] sm:$0x1]
    %v370 = vlaneseq
    %v371 = vshrl.u32 %v370, 7
    %v372 = vsub.s32 0, %v371
    %v373 = vrot.slane %v368, %v372
    %v375 = vadd.f32 %v365, %v373
    %vm376 = vcmask 105472
    %377 = vst.msk [vmem:[#allocation2] sm:$0xff] %vm376, %v375
    // Predicated region
    $region34: #{tpu_custom_call.1} parent=1 // pred_check
      _
    $region35: #{tpu_custom_call.1} parent=1 // pred_check_branch
      %379 = sbr.rel (0) target = $region37
    $region36: #{tpu_custom_call.1} parent=1 // pred_region
      %s381 = ssub.s32 128, 128
      %382 = vsyncadd [#allocation3], %s381
      %s384 = sshll.u32 [#allocation2], 4
      %s385 = int_to_ptr.vmem [resolvable:$true] %s384
      %387 = dma.vmem_to_hbm [thread:$0]  %s385, 128, %s8, [#allocation3]
    $region37: #{tpu_custom_call.1} parent=1 // pred_fallthru
      _
    // Predicated region
    $region38: #{tpu_custom_call.1} parent=1 // pred_check
      _
    $region39: #{tpu_custom_call.1} parent=1 // pred_check_branch
      %389 = sbr.rel (0) target = $region41
    $region40: #{tpu_custom_call.1} parent=1 // pred_region
      %390 = dma.done [#allocation3], 128
    $region41: #{tpu_custom_call.1} parent=1 // pred_fallthru
      _
    %391 = vsyncpa [#allocation3], 1

</llo_original>
